<compile_context>
chip_gen: v7x
topology: tpu7x:2x2x1
jax: 0.10.0
libtpu: 0.0.40
codegen_flags: <defaults>
</compile_context>

<pallas_src>
import functools

import jax
import jax.numpy as jnp
from jax.experimental import pallas as pl
from jax.experimental.pallas import tpu as pltpu


def _round_up(n, m):
    return ((n + m - 1) // m) * m


def _choose_batch_tiling(B, max_tile=512):
    """Pick (tile_b, B_pad): big tiles for throughput, >=2 grid steps for v7x megacore."""
    B = max(B, 1)
    tile_b = min(max_tile, _round_up(pl.cdiv(B, 2), 16))  # 16-sublane aligned (bf16 x)
    n_steps = max(2, pl.cdiv(B, tile_b))
    return tile_b, n_steps * tile_b


def _policy_mlp_kernel(x_ref, w1_ref, b1_ref, w2_ref, b2_ref, w3_ref, b3_ref, o_ref):
    # x: [TILE_B, in_dim] bf16; weights [in, out] bf16; biases [1, out] f32.
    x = x_ref[...]
    # Layer 1: Linear + ReLU  (bf16 matmul, f32 accumulate on the MXU)
    h1 = jnp.dot(x, w1_ref[...], preferred_element_type=jnp.float32) + b1_ref[...]
    h1 = jnp.maximum(h1, 0.0).astype(jnp.bfloat16)
    # Layer 2: Linear + ReLU
    h2 = jnp.dot(h1, w2_ref[...], preferred_element_type=jnp.float32) + b2_ref[...]
    h2 = jnp.maximum(h2, 0.0).astype(jnp.bfloat16)
    # Layer 3: Linear (logits, no activation) -> lane-dense f32 store
    o_ref[...] = (jnp.dot(h2, w3_ref[...], preferred_element_type=jnp.float32)
                  + b3_ref[...]).astype(o_ref.dtype)


def pack_params(params, state_dim):
    """One-time packing: zero-pad feature dims to 128 and cast weights to bf16.

    Weights are stored [in, out] (for x @ W); padding columns/rows are zero so the
    math in the valid region is exact. The input dim of w1 is left un-padded so x
    does not need lane padding in HBM.
    """
    in_dim = state_dim[0] * state_dim[1]
    hidden_dim = params["w1"].shape[1]
    action_dim = params["w3"].shape[1]
    H = _round_up(hidden_dim, 128)
    OUT = _round_up(action_dim, 128)

    w1 = jnp.zeros((in_dim, H), jnp.bfloat16).at[:, :hidden_dim].set(
        params["w1"].astype(jnp.bfloat16))
    b1 = jnp.zeros((1, H), jnp.float32).at[:, :hidden_dim].set(params["b1"])
    w2 = jnp.zeros((H, H), jnp.bfloat16).at[:hidden_dim, :hidden_dim].set(
        params["w2"].astype(jnp.bfloat16))
    b2 = jnp.zeros((1, H), jnp.float32).at[:, :hidden_dim].set(params["b2"])
    w3 = jnp.zeros((H, OUT), jnp.bfloat16).at[:hidden_dim, :action_dim].set(
        params["w3"].astype(jnp.bfloat16))
    b3 = jnp.zeros((1, OUT), jnp.float32).at[:, :action_dim].set(params["b3"])
    return {"w1": w1, "b1": b1, "w2": w2, "b2": b2, "w3": w3, "b3": b3}


def policy_network_forward(state, packed, *, state_dim, action_dim, max_tile_b=512):
    """Forward pass of PolicyNetwork using pre-packed (padded, bf16) parameters.

    state: [B, S0, S1] (or already [B, S0*S1]) float32
    packed: output of `pack_params`.
    Returns: [B, action_dim] float32 logits.
    """
    in_dim = state_dim[0] * state_dim[1]
    x = state.reshape(-1, in_dim)
    B = x.shape[0]
    H = packed["w1"].shape[1]
    OUT = packed["w3"].shape[1]

    tile_b, B_pad = _choose_batch_tiling(B, max_tile_b)

    # Only the batch dim is padded per call; feature dim stays un-padded in HBM.
    xp = jnp.zeros((B_pad, in_dim), jnp.bfloat16).at[:B].set(x.astype(jnp.bfloat16))

    grid = (B_pad // tile_b,)
    moving = lambda shape: pl.BlockSpec(shape, lambda i: (i, 0))      # batch-tiled
    resident = lambda shape: pl.BlockSpec(shape, lambda i: (0, 0))    # VMEM-resident weights

    out_padded = pl.pallas_call(
        _policy_mlp_kernel,
        out_shape=jax.ShapeDtypeStruct((B_pad, OUT), jnp.float32),
        grid=grid,
        in_specs=[
            moving((tile_b, in_dim)),
            resident((in_dim, H)), resident((1, H)),
            resident((H, H)), resident((1, H)),
            resident((H, OUT)), resident((1, OUT)),
        ],
        out_specs=moving((tile_b, OUT)),
        compiler_params=pltpu.CompilerParams(
            dimension_semantics=("parallel",),
        ),
    )(xp, packed["w1"], packed["b1"], packed["w2"], packed["b2"],
      packed["w3"], packed["b3"])

    return out_padded[:B, :action_dim]


def init_params(key, state_dim, action_dim, hidden_dim):
    """Deterministic init mirroring nn.Linear default (uniform +-1/sqrt(fan_in))."""
    in_dim = state_dim[0] * state_dim[1]
    ks = jax.random.split(key, 6)

    def linear(kw, kb, fan_in, fan_out):
        bound = 1.0 / jnp.sqrt(fan_in)
        # stored as [in, out] (transpose of PyTorch's [out, in]) for x @ W
        w = jax.random.uniform(kw, (fan_in, fan_out), jnp.float32, -bound, bound)
        b = jax.random.uniform(kb, (1, fan_out), jnp.float32, -bound, bound)
        return w, b

    w1, b1 = linear(ks[0], ks[1], in_dim, hidden_dim)
    w2, b2 = linear(ks[2], ks[3], hidden_dim, hidden_dim)
    w3, b3 = linear(ks[4], ks[5], hidden_dim, action_dim)
    return {"w1": w1, "b1": b1, "w2": w2, "b2": b2, "w3": w3, "b3": b3}


if __name__ == "__main__":
    key = jax.random.PRNGKey(0)
    k_param, k_state = jax.random.split(key)

    # Small shapes consistent with the module: grid-like state (4, 8), 8 actions, hidden 32.
    state_dim = (4, 8)
    action_dim = 8
    hidden_dim = 32
    batch = 2

    params = init_params(k_param, state_dim, action_dim, hidden_dim)
    state = jax.random.normal(k_state, (batch, state_dim[0], state_dim[1]), jnp.float32)

    # One-time weight packing (padded + bf16), hoisted out of the per-call path.
    packed = jax.tree.map(jax.block_until_ready, pack_params(params, state_dim))

    fwd = jax.jit(functools.partial(policy_network_forward,
                                    state_dim=state_dim, action_dim=action_dim))
    out = fwd(state, packed)
    out = jax.block_until_ready(out)
    assert out.shape == (batch, action_dim)
    assert out.dtype == jnp.float32

    # Reference 1: same bf16 quantization as the kernel, f32 accumulate (tight check).
    q = lambda a: a.astype(jnp.bfloat16).astype(jnp.float32)
    x = state.reshape(-1, state_dim[0] * state_dim[1])
    h1 = q(jnp.maximum(q(x) @ q(params["w1"]) + params["b1"], 0.0))
    h2 = q(jnp.maximum(h1 @ q(params["w2"]) + params["b2"], 0.0))
    ref_bf16 = h2 @ q(params["w3"]) + params["b3"]
    assert jnp.allclose(out, ref_bf16, atol=1e-2, rtol=1e-2)

    # Reference 2: full f32 module math (loose check against bf16 quantization error).
    h1f = jnp.maximum(x @ params["w1"] + params["b1"], 0.0)
    h2f = jnp.maximum(h1f @ params["w2"] + params["b2"], 0.0)
    ref_f32 = h2f @ params["w3"] + params["b3"]
    assert jnp.allclose(out, ref_f32, atol=5e-2, rtol=5e-2)

    print("KERNEL_OK")
</pallas_src>

<mosaic_0001>
module attributes {stable_mosaic.version = 11 : i64} {
  func.func @_policy_mlp_kernel(%arg0: i32, %arg1: memref<16x32xbf16, #tpu.memory_space<vmem>>, %arg2: memref<32x128xbf16, #tpu.memory_space<vmem>>, %arg3: memref<1x128xf32, #tpu.memory_space<vmem>>, %arg4: memref<128x128xbf16, #tpu.memory_space<vmem>>, %arg5: memref<1x128xf32, #tpu.memory_space<vmem>>, %arg6: memref<128x128xbf16, #tpu.memory_space<vmem>>, %arg7: memref<1x128xf32, #tpu.memory_space<vmem>>, %arg8: memref<16x128xf32, #tpu.memory_space<vmem>>) attributes {dimension_semantics = [#tpu.dimension_semantics<parallel>], iteration_bounds = array<i64: 2>, scalar_prefetch = 0 : i64, scratch_operands = 0 : i64, tpu.core_type = #tpu.core_type<tc>, window_params = [{transform_indices = @transform_0, window_bounds = array<i64: 16, 32>}, {pipeline_mode = #tpu.pipeline_mode<synchronous>, transform_indices = @transform_1, window_bounds = array<i64: 32, 128>}, {pipeline_mode = #tpu.pipeline_mode<synchronous>, transform_indices = @transform_2, window_bounds = array<i64: 1, 128>}, {pipeline_mode = #tpu.pipeline_mode<synchronous>, transform_indices = @transform_3, window_bounds = array<i64: 128, 128>}, {pipeline_mode = #tpu.pipeline_mode<synchronous>, transform_indices = @transform_4, window_bounds = array<i64: 1, 128>}, {pipeline_mode = #tpu.pipeline_mode<synchronous>, transform_indices = @transform_5, window_bounds = array<i64: 128, 128>}, {pipeline_mode = #tpu.pipeline_mode<synchronous>, transform_indices = @transform_6, window_bounds = array<i64: 1, 128>}, {transform_indices = @transform_7, window_bounds = array<i64: 16, 128>}]} {
    %c0 = arith.constant 0 : index
    %c0_0 = arith.constant 0 : index
    %0 = vector.load %arg1[%c0, %c0_0] : memref<16x32xbf16, #tpu.memory_space<vmem>>, vector<16x32xbf16>
    %c0_1 = arith.constant 0 : index
    %c0_2 = arith.constant 0 : index
    %1 = vector.load %arg2[%c0_1, %c0_2] : memref<32x128xbf16, #tpu.memory_space<vmem>>, vector<32x128xbf16>
    %cst = arith.constant dense<0.000000e+00> : vector<16x128xf32>
    %2 = tpu.matmul %0, %1, %cst {dimension_numbers = #tpu.dot_dimension_numbers<[1], [0], [0], [1], [0, 0, 1, 1], [], []>} : vector<16x32xbf16>, vector<32x128xbf16>, vector<16x128xf32> -> vector<16x128xf32>
    %c0_3 = arith.constant 0 : index
    %c0_4 = arith.constant 0 : index
    %3 = vector.load %arg3[%c0_3, %c0_4] : memref<1x128xf32, #tpu.memory_space<vmem>>, vector<1x128xf32>
    %4 = vector.broadcast %3 : vector<1x128xf32> to vector<16x128xf32>
    %5 = arith.addf %2, %4 : vector<16x128xf32>
    %cst_5 = arith.constant 0.000000e+00 : f32
    %6 = vector.broadcast %cst_5 : f32 to vector<16x128xf32>
    %7 = arith.maximumf %5, %6 : vector<16x128xf32>
    %8 = arith.truncf %7 : vector<16x128xf32> to vector<16x128xbf16>
    %c0_6 = arith.constant 0 : index
    %c0_7 = arith.constant 0 : index
    %9 = vector.load %arg4[%c0_6, %c0_7] : memref<128x128xbf16, #tpu.memory_space<vmem>>, vector<128x128xbf16>
    %cst_8 = arith.constant dense<0.000000e+00> : vector<16x128xf32>
    %10 = tpu.matmul %8, %9, %cst_8 {dimension_numbers = #tpu.dot_dimension_numbers<[1], [0], [0], [1], [0, 0, 1, 1], [], []>} : vector<16x128xbf16>, vector<128x128xbf16>, vector<16x128xf32> -> vector<16x128xf32>
    %c0_9 = arith.constant 0 : index
    %c0_10 = arith.constant 0 : index
    %11 = vector.load %arg5[%c0_9, %c0_10] : memref<1x128xf32, #tpu.memory_space<vmem>>, vector<1x128xf32>
    %12 = vector.broadcast %11 : vector<1x128xf32> to vector<16x128xf32>
    %13 = arith.addf %10, %12 : vector<16x128xf32>
    %cst_11 = arith.constant 0.000000e+00 : f32
    %14 = vector.broadcast %cst_11 : f32 to vector<16x128xf32>
    %15 = arith.maximumf %13, %14 : vector<16x128xf32>
    %16 = arith.truncf %15 : vector<16x128xf32> to vector<16x128xbf16>
    %c0_12 = arith.constant 0 : index
    %c0_13 = arith.constant 0 : index
    %17 = vector.load %arg6[%c0_12, %c0_13] : memref<128x128xbf16, #tpu.memory_space<vmem>>, vector<128x128xbf16>
    %cst_14 = arith.constant dense<0.000000e+00> : vector<16x128xf32>
    %18 = tpu.matmul %16, %17, %cst_14 {dimension_numbers = #tpu.dot_dimension_numbers<[1], [0], [0], [1], [0, 0, 1, 1], [], []>} : vector<16x128xbf16>, vector<128x128xbf16>, vector<16x128xf32> -> vector<16x128xf32>
    %c0_15 = arith.constant 0 : index
    %c0_16 = arith.constant 0 : index
    %19 = vector.load %arg7[%c0_15, %c0_16] : memref<1x128xf32, #tpu.memory_space<vmem>>, vector<1x128xf32>
    %20 = vector.broadcast %19 : vector<1x128xf32> to vector<16x128xf32>
    %21 = arith.addf %18, %20 : vector<16x128xf32>
    %c0_17 = arith.constant 0 : index
    %c0_18 = arith.constant 0 : index
    %22 = vector.load %arg8[%c0_17, %c0_18] : memref<16x128xf32, #tpu.memory_space<vmem>>, vector<16x128xf32>
    tpu.vector_store %arg8[%c0_17, %c0_18], %21 {strides = array<i32>} : memref<16x128xf32, #tpu.memory_space<vmem>>, vector<16x128xf32>,
    return
  }
  func.func @transform_0(%arg0: i32) -> (i32, i32) {
    %c0_i32 = arith.constant 0 : i32
    %c0_i32_0 = arith.constant 0 : i32
    return %arg0, %c0_i32 : i32, i32
  }
  func.func @transform_1(%arg0: i32) -> (i32, i32) {
    %c0_i32 = arith.constant 0 : i32
    %c0_i32_0 = arith.constant 0 : i32
    %c0_i32_1 = arith.constant 0 : i32
    return %c0_i32, %c0_i32_0 : i32, i32
  }
  func.func @transform_2(%arg0: i32) -> (i32, i32) {
    %c0_i32 = arith.constant 0 : i32
    %c0_i32_0 = arith.constant 0 : i32
    %c0_i32_1 = arith.constant 0 : i32
    return %c0_i32, %c0_i32_0 : i32, i32
  }
  func.func @transform_3(%arg0: i32) -> (i32, i32) {
    %c0_i32 = arith.constant 0 : i32
    %c0_i32_0 = arith.constant 0 : i32
    %c0_i32_1 = arith.constant 0 : i32
    return %c0_i32, %c0_i32_0 : i32, i32
  }
  func.func @transform_4(%arg0: i32) -> (i32, i32) {
    %c0_i32 = arith.constant 0 : i32
    %c0_i32_0 = arith.constant 0 : i32
    %c0_i32_1 = arith.constant 0 : i32
    return %c0_i32, %c0_i32_0 : i32, i32
  }
  func.func @transform_5(%arg0: i32) -> (i32, i32) {
    %c0_i32 = arith.constant 0 : i32
    %c0_i32_0 = arith.constant 0 : i32
    %c0_i32_1 = arith.constant 0 : i32
    return %c0_i32, %c0_i32_0 : i32, i32
  }
  func.func @transform_6(%arg0: i32) -> (i32, i32) {
    %c0_i32 = arith.constant 0 : i32
    %c0_i32_0 = arith.constant 0 : i32
    %c0_i32_1 = arith.constant 0 : i32
    return %c0_i32, %c0_i32_0 : i32, i32
  }
  func.func @transform_7(%arg0: i32) -> (i32, i32) {
    %c0_i32 = arith.constant 0 : i32
    %c0_i32_0 = arith.constant 0 : i32
    return %arg0, %c0_i32 : i32, i32
  }
}

</mosaic_0001>

<llo_original>
// kernel: policy_network_forward.1
$region0: #{policy_network_forward.1}
  #allocation0 [shape = 'u32[]', space=smem, size = 0x4, offset = 0x4, fixed_abs, tag = 'smem constant byte address 0x4 - core index']
  #allocation1 [shape = 'u32[144,128]{1,0:T(1,128)}', space=vmem, size = 0x12000, scoped, tag = 'internal scratch']
  %s0 = inlined_call_operand.vmem [shape: bf16[32,32], index: 0, kind: input, shape index: {}]
  %s1 = inlined_call_operand.vmem [shape: bf16[32,128], index: 1, kind: input, shape index: {}]
  %s2 = inlined_call_operand.vmem [shape: f32[1,128], index: 2, kind: input, shape index: {}]
  %s3 = inlined_call_operand.hbm [shape: bf16[128,128], index: 3, kind: input, shape index: {}]
  %s4 = inlined_call_operand.vmem [shape: f32[1,128], index: 4, kind: input, shape index: {}]
  %s5 = inlined_call_operand.hbm [shape: bf16[128,128], index: 5, kind: input, shape index: {}]
  %s6 = inlined_call_operand.vmem [shape: f32[1,128], index: 6, kind: input, shape index: {}]
  %s7 = inlined_call_operand.vmem [shape: f32[32,128], index: 7, kind: output, shape index: {}]
  %s8 = sld [smem:[#allocation0]]
  $region69: #{policy_network_forward.1} parent=0
    _
  %s10 = ssub.s32 1, %s8
  %s11 = scalar_select 0, %s10, %s8
  $region1: #{policy_network_forward.1} parent=0
    #allocation2 [shape = 'u8[32768]{0}', space=vmem, size = 0x8000, scoped, tag = 'input window, operand 3, single buffered']
    #allocation3 [shape = 's32[2]{0}', space=sflag, size = 0x8, scoped, tag = 'scoped memory for policy_network_forward.1']
    #allocation4 [shape = 'u8[32768]{0}', space=vmem, size = 0x8000, scoped, tag = 'input window, operand 5, single buffered']
    #allocation5 [shape = 's32[1]{0}', space=sflag, size = 0x4, scoped, tag = 'scoped memory for policy_network_forward.1']
    %12 = vsyncpa [#allocation3], 0
    %13 = vsyncpa [#allocation5], 0
    loop: start=0, step=1, limit=4
    $region2: #{policy_network_forward.1} parent=1 // loop_pre_header
      _
    $region3: #{policy_network_forward.1} parent=1 // loop_header
      %s15 = sphi 0, %s19
      %p16 = scmp.ge.s32.totalorder %s15, 4
      %s25 = sphi 0, %s27
      %s28 = sphi 0, %s25
      %s29 = sphi 0, %s28
      %s45 = sphi 0, %s29
      %s49 = sphi 0, %s49
      %s51 = sphi 0, %s49
      %s52 = sphi 0, %s51
      %s66 = sphi 0, %s52
      %s70 = sphi 0, %s70
      %s72 = sphi 0, %s70
      %s73 = sphi 0, %s72
      %s87 = sphi 0, %s73
      %s91 = sphi 0, %s91
      %s93 = sphi 0, %s91
      %s94 = sphi 0, %s93
      %s108 = sphi 0, %s94
      %s112 = sphi 0, %s112
      %s114 = sphi 0, %s112
      %s115 = sphi 0, %s114
      %s129 = sphi 0, %s115
      %s133 = sphi 0, %s133
      %s135 = sphi 0, %s133
      %s136 = sphi 0, %s135
      %s150 = sphi 0, %s136
      %s154 = sphi 0, %s154
      %s156 = sphi 0, %s154
      %s157 = sphi 0, %s156
      %s171 = sphi 0, %s157
      %s177 = sphi 0, %s179
      %s180 = sphi 0, %s177
      %s181 = sphi 0, %s180
      %s197 = sphi 0, %s181
    $region4: #{policy_network_forward.1} parent=1 // loop_header_branch
      %18 = sbr.rel (%p16) target = $region8
    $region5: #{policy_network_forward.1} parent=1 // loop_body
      %s20 = ssub.s32 %s15, 1
      %s21 = ssub.s32 %s15, 2
      %s22 = sadd.s32 %s15, 1
      %s23 = ssub.s32 %s15, %s22
      %p24 = scmp.eq.s32.totalorder %s23, 0
      %s26 = sadd.s32 %s25, 1
      %s27 = scalar_select %p24, %s25, %s26
      %p30 = pneg %p24
      %p31 = scmp.eq.s32.totalorder %s15, 1
      %p32 = por %p30, %p31
      %p33 = scmp.ne.s32.totalorder %s25, %s28
      %p34 = scmp.eq.s32.totalorder %s15, 0
      %p35 = por %p33, %p34
      %p36 = scmp.ne.s32.totalorder %s25, %s28
      %p37 = scmp.eq.s32.totalorder %s20, 1
      %p38 = por %p36, %p37
      %p39 = scmp.ne.s32.totalorder %s28, %s29
      %p40 = scmp.eq.s32.totalorder %s20, 0
      %p41 = por %p39, %p40
      %p42 = scmp.ne.s32.totalorder %s28, %s29
      %p43 = scmp.eq.s32.totalorder %s21, 1
      %p44 = por %p42, %p43
      %p46 = scmp.ne.s32.totalorder %s29, %s45
      %p47 = scmp.eq.s32.totalorder %s21, 0
      %p48 = por %p46, %p47
      %s50 = sadd.s32 %s49, 1
      %p53 = scmp.eq.s32.totalorder %s15, 1
      %p54 = scmp.ne.s32.totalorder %s49, %s51
      %p55 = scmp.eq.s32.totalorder %s15, 0
      %p56 = por %p54, %p55
      %p57 = scmp.ne.s32.totalorder %s49, %s51
      %p58 = scmp.eq.s32.totalorder %s20, 1
      %p59 = por %p57, %p58
      %p60 = scmp.ne.s32.totalorder %s51, %s52
      %p61 = scmp.eq.s32.totalorder %s20, 0
      %p62 = por %p60, %p61
      %p63 = scmp.ne.s32.totalorder %s51, %s52
      %p64 = scmp.eq.s32.totalorder %s21, 1
      %p65 = por %p63, %p64
      %p67 = scmp.ne.s32.totalorder %s52, %s66
      %p68 = scmp.eq.s32.totalorder %s21, 0
      %p69 = por %p67, %p68
      %s71 = sadd.s32 %s70, 1
      %p74 = scmp.eq.s32.totalorder %s15, 1
      %p75 = scmp.ne.s32.totalorder %s70, %s72
      %p76 = scmp.eq.s32.totalorder %s15, 0
      %p77 = por %p75, %p76
      %p78 = scmp.ne.s32.totalorder %s70, %s72
      %p79 = scmp.eq.s32.totalorder %s20, 1
      %p80 = por %p78, %p79
      %p81 = scmp.ne.s32.totalorder %s72, %s73
      %p82 = scmp.eq.s32.totalorder %s20, 0
      %p83 = por %p81, %p82
      %p84 = scmp.ne.s32.totalorder %s72, %s73
      %p85 = scmp.eq.s32.totalorder %s21, 1
      %p86 = por %p84, %p85
      %p88 = scmp.ne.s32.totalorder %s73, %s87
      %p89 = scmp.eq.s32.totalorder %s21, 0
      %p90 = por %p88, %p89
      %s92 = sadd.s32 %s91, 1
      %p95 = scmp.eq.s32.totalorder %s15, 1
      %p96 = scmp.ne.s32.totalorder %s91, %s93
      %p97 = scmp.eq.s32.totalorder %s15, 0
      %p98 = por %p96, %p97
      %p99 = scmp.ne.s32.totalorder %s91, %s93
      %p100 = scmp.eq.s32.totalorder %s20, 1
      %p101 = por %p99, %p100
      %p102 = scmp.ne.s32.totalorder %s93, %s94
      %p103 = scmp.eq.s32.totalorder %s20, 0
      %p104 = por %p102, %p103
      %p105 = scmp.ne.s32.totalorder %s93, %s94
      %p106 = scmp.eq.s32.totalorder %s21, 1
      %p107 = por %p105, %p106
      %p109 = scmp.ne.s32.totalorder %s94, %s108
      %p110 = scmp.eq.s32.totalorder %s21, 0
      %p111 = por %p109, %p110
      %s113 = sadd.s32 %s112, 1
      %p116 = scmp.eq.s32.totalorder %s15, 1
      %p117 = scmp.ne.s32.totalorder %s112, %s114
      %p118 = scmp.eq.s32.totalorder %s15, 0
      %p119 = por %p117, %p118
      %p120 = scmp.ne.s32.totalorder %s112, %s114
      %p121 = scmp.eq.s32.totalorder %s20, 1
      %p122 = por %p120, %p121
      %p123 = scmp.ne.s32.totalorder %s114, %s115
      %p124 = scmp.eq.s32.totalorder %s20, 0
      %p125 = por %p123, %p124
      %p126 = scmp.ne.s32.totalorder %s114, %s115
      %p127 = scmp.eq.s32.totalorder %s21, 1
      %p128 = por %p126, %p127
      %p130 = scmp.ne.s32.totalorder %s115, %s129
      %p131 = scmp.eq.s32.totalorder %s21, 0
      %p132 = por %p130, %p131
      %s134 = sadd.s32 %s133, 1
      %p137 = scmp.eq.s32.totalorder %s15, 1
      %p138 = scmp.ne.s32.totalorder %s133, %s135
      %p139 = scmp.eq.s32.totalorder %s15, 0
      %p140 = por %p138, %p139
      %p141 = scmp.ne.s32.totalorder %s133, %s135
      %p142 = scmp.eq.s32.totalorder %s20, 1
      %p143 = por %p141, %p142
      %p144 = scmp.ne.s32.totalorder %s135, %s136
      %p145 = scmp.eq.s32.totalorder %s20, 0
      %p146 = por %p144, %p145
      %p147 = scmp.ne.s32.totalorder %s135, %s136
      %p148 = scmp.eq.s32.totalorder %s21, 1
      %p149 = por %p147, %p148
      %p151 = scmp.ne.s32.totalorder %s136, %s150
      %p152 = scmp.eq.s32.totalorder %s21, 0
      %p153 = por %p151, %p152
      %s155 = sadd.s32 %s154, 1
      %p158 = scmp.eq.s32.totalorder %s15, 1
      %p159 = scmp.ne.s32.totalorder %s154, %s156
      %p160 = scmp.eq.s32.totalorder %s15, 0
      %p161 = por %p159, %p160
      %p162 = scmp.ne.s32.totalorder %s154, %s156
      %p163 = scmp.eq.s32.totalorder %s20, 1
      %p164 = por %p162, %p163
      %p165 = scmp.ne.s32.totalorder %s156, %s157
      %p166 = scmp.eq.s32.totalorder %s20, 0
      %p167 = por %p165, %p166
      %p168 = scmp.ne.s32.totalorder %s156, %s157
      %p169 = scmp.eq.s32.totalorder %s21, 1
      %p170 = por %p168, %p169
      %p172 = scmp.ne.s32.totalorder %s157, %s171
      %p173 = scmp.eq.s32.totalorder %s21, 0
      %p174 = por %p172, %p173
      %s175 = ssub.s32 %s15, %s22
      %p176 = scmp.eq.s32.totalorder %s175, 0
      %s178 = sadd.s32 %s177, 1
      %s179 = scalar_select %p176, %s177, %s178
      %p182 = pneg %p176
      %p183 = scmp.eq.s32.totalorder %s15, 1
      %p184 = por %p182, %p183
      %p185 = scmp.ne.s32.totalorder %s177, %s180
      %p186 = scmp.eq.s32.totalorder %s15, 0
      %p187 = por %p185, %p186
      %p188 = scmp.ne.s32.totalorder %s177, %s180
      %p189 = scmp.eq.s32.totalorder %s20, 1
      %p190 = por %p188, %p189
      %p191 = scmp.ne.s32.totalorder %s180, %s181
      %p192 = scmp.eq.s32.totalorder %s20, 0
      %p193 = por %p191, %p192
      %p194 = scmp.ne.s32.totalorder %s180, %s181
      %p195 = scmp.eq.s32.totalorder %s21, 1
      %p196 = por %p194, %p195
      %p198 = scmp.ne.s32.totalorder %s181, %s197
      %p199 = scmp.eq.s32.totalorder %s21, 0
      %p200 = por %p198, %p199
      %p201 = scmp.le.s32.totalorder 1, %s15
      %p202 = scmp.lt.s32.totalorder %s15, 3
      %p203 = pnand %p201, %p202
      %p204 = pneg %p203
      // Predicated region
      $region9: #{policy_network_forward.1} parent=5 // pred_check
        _
      $region10: #{policy_network_forward.1} parent=5 // pred_check_branch
        %206 = sbr.rel (%p203) target = $region12
      $region11: #{policy_network_forward.1} parent=5 // pred_region
        %s207 = ssub.s32 %s15, 1
        // Predicated region
        $region13: #{policy_network_forward.1} parent=11 // pred_check
          %p208 = pneg %p62
        $region14: #{policy_network_forward.1} parent=11 // pred_check_branch
          %210 = sbr.rel (%p208) target = $region16
        $region15: #{policy_network_forward.1} parent=11 // pred_region
          _
        $region16: #{policy_network_forward.1} parent=11 // pred_fallthru
          _
        // Predicated region
        $region17: #{policy_network_forward.1} parent=11 // pred_check
          %p211 = pneg %p83
        $region18: #{policy_network_forward.1} parent=11 // pred_check_branch
          %213 = sbr.rel (%p211) target = $region20
        $region19: #{policy_network_forward.1} parent=11 // pred_region
          _
        $region20: #{policy_network_forward.1} parent=11 // pred_fallthru
          _
        // Predicated region
        $region21: #{policy_network_forward.1} parent=11 // pred_check
          %p214 = pneg %p104
        $region22: #{policy_network_forward.1} parent=11 // pred_check_branch
          %216 = sbr.rel (%p214) target = $region24
        $region23: #{policy_network_forward.1} parent=11 // pred_region
          %s218 = ssub.s32 1024, 1024
          %219 = vsyncadd [#allocation3], %s218
          %s220 = sshll.u32 [#allocation2], 4
          %s221 = int_to_ptr.vmem [resolvable:$true] %s220
          %226 = dma.hbm_to_vmem [thread:$0]  %s3, 1024, %s221, [#allocation3], 64, 64, 4
        $region24: #{policy_network_forward.1} parent=11 // pred_fallthru
          _
        // Predicated region
        $region25: #{policy_network_forward.1} parent=11 // pred_check
          %p227 = pneg %p125
        $region26: #{policy_network_forward.1} parent=11 // pred_check_branch
          %229 = sbr.rel (%p227) target = $region28
        $region27: #{policy_network_forward.1} parent=11 // pred_region
          _
        $region28: #{policy_network_forward.1} parent=11 // pred_fallthru
          _
        // Predicated region
        $region29: #{policy_network_forward.1} parent=11 // pred_check
          %p230 = pneg %p146
        $region30: #{policy_network_forward.1} parent=11 // pred_check_branch
          %232 = sbr.rel (%p230) target = $region32
        $region31: #{policy_network_forward.1} parent=11 // pred_region
          %s234 = ssub.s32 1024, 1024
          %235 = vsyncadd [#allocation5], %s234
          %s236 = sshll.u32 [#allocation4], 4
          %s237 = int_to_ptr.vmem [resolvable:$true] %s236
          %242 = dma.hbm_to_vmem [thread:$0]  %s5, 1024, %s237, [#allocation5], 64, 64, 4
        $region32: #{policy_network_forward.1} parent=11 // pred_fallthru
          _
        // Predicated region
        $region33: #{policy_network_forward.1} parent=11 // pred_check
          %p243 = pneg %p167
        $region34: #{policy_network_forward.1} parent=11 // pred_check_branch
          %245 = sbr.rel (%p243) target = $region36
        $region35: #{policy_network_forward.1} parent=11 // pred_region
          _
        $region36: #{policy_network_forward.1} parent=11 // pred_fallthru
          _
      $region12: #{policy_network_forward.1} parent=5 // pred_fallthru
        _
      %p246 = scmp.lt.s32.totalorder %s15, 2
      // Predicated region
      $region37: #{policy_network_forward.1} parent=5 // pred_check
        %p247 = pneg %p246
      $region38: #{policy_network_forward.1} parent=5 // pred_check_branch
        %249 = sbr.rel (%p247) target = $region40
      $region39: #{policy_network_forward.1} parent=5 // pred_region
        // Predicated region
        $region41: #{policy_network_forward.1} parent=39 // pred_check
          %p250 = pneg %p35
        $region42: #{policy_network_forward.1} parent=39 // pred_check_branch
          %252 = sbr.rel (%p250) target = $region44
        $region43: #{policy_network_forward.1} parent=39 // pred_region
          %s253 = smul.u32 2, %s15
          %p254 = scmp.lt.s32.totalorder %s253, 3
          %s255 = scalar_select %p254, %s253, 3
          %s256 = smul.addr %s255, 4
          %s257 = scalar_lea.vmem %s0, %s256
          %s258 = smul.u32 2, %s15
        $region44: #{policy_network_forward.1} parent=39 // pred_fallthru
          _
      $region40: #{policy_network_forward.1} parent=5 // pred_fallthru
        _
      %p259 = scmp.le.s32.totalorder 1, %s15
      %p260 = scmp.lt.s32.totalorder %s15, 3
      %p261 = pnand %p259, %p260
      %p262 = pneg %p261
      // Predicated region
      $region45: #{policy_network_forward.1} parent=5 // pred_check
        _
      $region46: #{policy_network_forward.1} parent=5 // pred_check_branch
        %264 = sbr.rel (%p261) target = $region48
      $region47: #{policy_network_forward.1} parent=5 // pred_region
        %s265 = ssub.s32 %s15, 1
        // Predicated region
        $region49: #{policy_network_forward.1} parent=47 // pred_check
          %p266 = pneg %p104
        $region50: #{policy_network_forward.1} parent=47 // pred_check_branch
          %268 = sbr.rel (%p266) target = $region52
        $region51: #{policy_network_forward.1} parent=47 // pred_region
          %269 = dma.done [#allocation3], 1024
        $region52: #{policy_network_forward.1} parent=47 // pred_fallthru
          _
        // Predicated region
        $region53: #{policy_network_forward.1} parent=47 // pred_check
          %p270 = pneg %p146
        $region54: #{policy_network_forward.1} parent=47 // pred_check_branch
          %272 = sbr.rel (%p270) target = $region56
        $region55: #{policy_network_forward.1} parent=47 // pred_region
          %273 = dma.done [#allocation5], 1024
        $region56: #{policy_network_forward.1} parent=47 // pred_fallthru
          _
        %s274 = smul.u32 2, %s20
        %p275 = scmp.lt.s32.totalorder %s274, 3
        %s276 = scalar_select %p275, %s274, 3
        %s277 = smul.addr %s276, 4
        %s278 = scalar_lea.vmem %s0, %s277
        %p279 = pneg %p41
        %p280 = pneg %p38
        %p281 = pneg %p62
        %p282 = pneg %p59
        %p283 = pneg %p83
        %p284 = pneg %p80
        %p285 = pneg %p104
        %p286 = pneg %p101
        %p287 = pneg %p125
        %p288 = pneg %p122
        %p289 = pneg %p146
        %p290 = pneg %p143
        %p291 = pneg %p167
        %p292 = pneg %p164
        %p293 = pneg %p193
        %p294 = pneg %p190
        %s295 = smul.u32 2, %s20
        %p296 = scmp.lt.s32.totalorder %s295, 3
        %s297 = scalar_select %p296, %s295, 3
        %s298 = smul.addr %s297, 8
        %s299 = scalar_lea.vmem %s7, %s298
        %s300 = smul.u32 2, %s20
        %p301 = scmp.lt.s32.totalorder %s300, 3
        %s302 = scalar_select %p301, %s300, 3
        %s303 = smul.addr %s302, 4
        %s304 = scalar_lea.vmem %s0, %s303
        %s305 = smul.u32 2, %s20
        %s306 = smul.u32 2, %s20
        %p307 = scmp.lt.s32.totalorder %s306, 3
        %s308 = scalar_select %p307, %s306, 3
        %s309 = smul.addr %s308, 8
        %s310 = scalar_lea.vmem %s7, %s309
        %s311 = smul.u32 2, %s20
        %v313 = vld [vmem:[%s304] sm:$0xf]
        %v314 = vld [vmem:[%s304 + $0x4] sm:$0xf]
        %v315 = vld [vmem:[%s1] sm:$0xf]
        %v316 = vld [vmem:[%s1 + $0x4] sm:$0xf]
        %v317 = vld [vmem:[%s1 + $0x8] sm:$0xf]
        %v318 = vld [vmem:[%s1 + $0xc] sm:$0xf]
        %v319 = vld [vmem:[%s2] sm:$0x1]
        %v321 = vlaneseq
        %v322 = vshrl.u32 %v321, 7
        %v323 = vsub.s32 0, %v322
        %v324 = vrot.slane %v319, %v323
        %v328 = vunpack.c.l.b16 %v313
        %v329 = vunpack.c.l.b16 %v314
        %v330 = vpack.c.b16 %v329, %v328
        %v335 = vunpack.c.l.b16 %v315
        %v336 = vunpack.c.l.b16 %v316
        %v337 = vunpack.c.l.b16 %v317
        %v338 = vunpack.c.l.b16 %v318
        %v339 = vpack.c.b16 %v336, %v335
        %v340 = vpack.c.b16 %v338, %v337
        %vm343 = vcmask 261120
        %v345 = vsel %vm343, %v330, 0
        %347 = vmatprep.subr.bf16.mxu0 0
        %348 = vmatpush1.bf16.msra.mxu0 %v339
        %349 = vmatprep.subr.bf16.mxu0 0
        %350 = vmatpush1.bf16.msra.mxu0 %v340
        %351 = vmatprep.subr.bf16.mxu0 0
        %352 = vmatpush1.bf16.msra.mxu0 0
        %353 = vmatprep.subr.bf16.mxu0 0
        %354 = vmatpush1.bf16.msra.mxu0 0
        %355 = vmatprep.subr.bf16.mxu0 0
        %356 = vmatpush1.bf16.msra.mxu0 0
        %357 = vmatprep.subr.bf16.mxu0 0
        %358 = vmatpush1.bf16.msra.mxu0 0
        %359 = vmatprep.subr.bf16.mxu0 0
        %360 = vmatpush1.bf16.msra.mxu0 0
        %361 = vmatprep.subr.bf16.mxu0 0
        %362 = vmatpush1.bf16.msra.mxu0 0
        %363 = vmatprep.subr.bf16.mxu0 0
        %364 = vmatpush1.bf16.msra.mxu0 0
        %365 = vmatprep.subr.bf16.mxu0 0
        %366 = vmatpush1.bf16.msra.mxu0 0
        %367 = vmatprep.subr.bf16.mxu0 0
        %368 = vmatpush1.bf16.msra.mxu0 0
        %369 = vmatprep.subr.bf16.mxu0 0
        %370 = vmatpush1.bf16.msra.mxu0 0
        %371 = vmatprep.subr.bf16.mxu0 0
        %372 = vmatpush1.bf16.msra.mxu0 0
        %373 = vmatprep.subr.bf16.mxu0 0
        %374 = vmatpush1.bf16.msra.mxu0 0
        %375 = vmatprep.subr.bf16.mxu0 0
        %376 = vmatpush1.bf16.msra.mxu0 0
        %377 = vmatprep.subr.bf16.mxu0 0
        %378 = vmatpush1.bf16.msra.mxu0 0
        %379 = vmatprep.mubr.bf16.mxu0 0
        %380 = vmatmul.mubr.bf16.gmra.mrb[0].mxu0 %v345
        %v381 = vpop.f32.mrb[0].mxu0
        %v382 = vadd.f32 %v324, %v381
        %v383 = vpop.f32.mrb[0].mxu0
        %v384 = vpop.f32.mrb[0].mxu0
        %v385 = vadd.f32 %v324, %v384
        %v386 = vpop.f32.mrb[0].mxu0
        %387 = vdwg.mxu0
        %v388 = vmax.f32 %v382, 0.0
        %v389 = vmax.f32 %v385, 0.0
        %v390 = vpack.c.bf16 %v389, %v388
        %v391 = vld [vmem:[#allocation2] sm:$0xf]
        %v392 = vld [vmem:[#allocation2 + $0x4] sm:$0xf]
        %v393 = vld [vmem:[#allocation2 + $0x8] sm:$0xf]
        %v394 = vld [vmem:[#allocation2 + $0xc] sm:$0xf]
        %v395 = vld [vmem:[#allocation2 + $0x10] sm:$0xf]
        %v396 = vld [vmem:[#allocation2 + $0x14] sm:$0xf]
        %v397 = vld [vmem:[#allocation2 + $0x18] sm:$0xf]
        %v398 = vld [vmem:[#allocation2 + $0x1c] sm:$0xf]
        %v399 = vld [vmem:[#allocation2 + $0x20] sm:$0xf]
        %v400 = vld [vmem:[#allocation2 + $0x24] sm:$0xf]
        %v401 = vld [vmem:[#allocation2 + $0x28] sm:$0xf]
        %v402 = vld [vmem:[#allocation2 + $0x2c] sm:$0xf]
        %v403 = vld [vmem:[#allocation2 + $0x30] sm:$0xf]
        %v404 = vld [vmem:[#allocation2 + $0x34] sm:$0xf]
        %v405 = vld [vmem:[#allocation2 + $0x38] sm:$0xf]
        %v406 = vld [vmem:[#allocation2 + $0x3c] sm:$0xf]
        %v407 = vld [vmem:[%s4] sm:$0x1]
        %v409 = vlaneseq
        %v410 = vshrl.u32 %v409, 7
        %v411 = vsub.s32 0, %v410
        %v412 = vrot.slane %v407, %v411
        %v430 = vunpack.c.l.b16 %v391
        %v431 = vunpack.c.l.b16 %v392
        %v432 = vunpack.c.l.b16 %v393
        %v433 = vunpack.c.l.b16 %v394
        %v434 = vunpack.c.l.b16 %v395
        %v435 = vunpack.c.l.b16 %v396
        %v436 = vunpack.c.l.b16 %v397
        %v437 = vunpack.c.l.b16 %v398
        %v438 = vunpack.c.l.b16 %v399
        %v439 = vunpack.c.l.b16 %v400
        %v440 = vunpack.c.l.b16 %v401
        %v441 = vunpack.c.l.b16 %v402
        %v442 = vunpack.c.l.b16 %v403
        %v443 = vunpack.c.l.b16 %v404
        %v444 = vunpack.c.l.b16 %v405
        %v445 = vunpack.c.l.b16 %v406
        %v446 = vpack.c.b16 %v431, %v430
        %v447 = vpack.c.b16 %v433, %v432
        %v448 = vpack.c.b16 %v435, %v434
        %v449 = vpack.c.b16 %v437, %v436
        %v450 = vpack.c.b16 %v439, %v438
        %v451 = vpack.c.b16 %v441, %v440
        %v452 = vpack.c.b16 %v443, %v442
        %v453 = vpack.c.b16 %v445, %v444
        %462 = vmatprep.subr.bf16.mxu0 0
        %463 = vmatpush1.bf16.msra.mxu0 %v446
        %464 = vmatprep.subr.bf16.mxu0 0
        %465 = vmatpush1.bf16.msra.mxu0 %v447
        %466 = vmatprep.subr.bf16.mxu0 0
        %467 = vmatpush1.bf16.msra.mxu0 %v448
        %468 = vmatprep.subr.bf16.mxu0 0
        %469 = vmatpush1.bf16.msra.mxu0 %v449
        %470 = vmatprep.subr.bf16.mxu0 0
        %471 = vmatpush1.bf16.msra.mxu0 %v450
        %472 = vmatprep.subr.bf16.mxu0 0
        %473 = vmatpush1.bf16.msra.mxu0 %v451
        %474 = vmatprep.subr.bf16.mxu0 0
        %475 = vmatpush1.bf16.msra.mxu0 %v452
        %476 = vmatprep.subr.bf16.mxu0 0
        %477 = vmatpush1.bf16.msra.mxu0 %v453
        %478 = vmatprep.subr.bf16.mxu0 0
        %479 = vmatpush1.bf16.msra.mxu0 0
        %480 = vmatprep.subr.bf16.mxu0 0
        %481 = vmatpush1.bf16.msra.mxu0 0
        %482 = vmatprep.subr.bf16.mxu0 0
        %483 = vmatpush1.bf16.msra.mxu0 0
        %484 = vmatprep.subr.bf16.mxu0 0
        %485 = vmatpush1.bf16.msra.mxu0 0
        %486 = vmatprep.subr.bf16.mxu0 0
        %487 = vmatpush1.bf16.msra.mxu0 0
        %488 = vmatprep.subr.bf16.mxu0 0
        %489 = vmatpush1.bf16.msra.mxu0 0
        %490 = vmatprep.subr.bf16.mxu0 0
        %491 = vmatpush1.bf16.msra.mxu0 0
        %492 = vmatprep.subr.bf16.mxu0 0
        %493 = vmatpush1.bf16.msra.mxu0 0
        %494 = vmatprep.mubr.bf16.mxu0 0
        %495 = vmatmul.mubr.bf16.gmra.mrb[0].mxu0 %v390
        %v496 = vpop.f32.mrb[0].mxu0
        %v497 = vadd.f32 %v412, %v496
        %v498 = vpop.f32.mrb[0].mxu0
        %v499 = vpop.f32.mrb[0].mxu0
        %v500 = vadd.f32 %v412, %v499
        %v501 = vpop.f32.mrb[0].mxu0
        %502 = vdwg.mxu0
        %v503 = vmax.f32 %v497, 0.0
        %v504 = vmax.f32 %v500, 0.0
        %v505 = vpack.c.bf16 %v504, %v503
        %v506 = vld [vmem:[#allocation4] sm:$0xf]
        %v507 = vld [vmem:[#allocation4 + $0x4] sm:$0xf]
        %v508 = vld [vmem:[#allocation4 + $0x8] sm:$0xf]
        %v509 = vld [vmem:[#allocation4 + $0xc] sm:$0xf]
        %v510 = vld [vmem:[#allocation4 + $0x10] sm:$0xf]
        %v511 = vld [vmem:[#allocation4 + $0x14] sm:$0xf]
        %v512 = vld [vmem:[#allocation4 + $0x18] sm:$0xf]
        %v513 = vld [vmem:[#allocation4 + $0x1c] sm:$0xf]
        %v514 = vld [vmem:[#allocation4 + $0x20] sm:$0xf]
        %v515 = vld [vmem:[#allocation4 + $0x24] sm:$0xf]
        %v516 = vld [vmem:[#allocation4 + $0x28] sm:$0xf]
        %v517 = vld [vmem:[#allocation4 + $0x2c] sm:$0xf]
        %v518 = vld [vmem:[#allocation4 + $0x30] sm:$0xf]
        %v519 = vld [vmem:[#allocation4 + $0x34] sm:$0xf]
        %v520 = vld [vmem:[#allocation4 + $0x38] sm:$0xf]
        %v521 = vld [vmem:[#allocation4 + $0x3c] sm:$0xf]
        %v522 = vld [vmem:[%s6] sm:$0x1]
        %v524 = vlaneseq
        %v525 = vshrl.u32 %v524, 7
        %v526 = vsub.s32 0, %v525
        %v527 = vrot.slane %v522, %v526
        %v545 = vunpack.c.l.b16 %v506
        %v546 = vunpack.c.l.b16 %v507
        %v547 = vunpack.c.l.b16 %v508
        %v548 = vunpack.c.l.b16 %v509
        %v549 = vunpack.c.l.b16 %v510
        %v550 = vunpack.c.l.b16 %v511
        %v551 = vunpack.c.l.b16 %v512
        %v552 = vunpack.c.l.b16 %v513
        %v553 = vunpack.c.l.b16 %v514
        %v554 = vunpack.c.l.b16 %v515
        %v555 = vunpack.c.l.b16 %v516
        %v556 = vunpack.c.l.b16 %v517
        %v557 = vunpack.c.l.b16 %v518
        %v558 = vunpack.c.l.b16 %v519
        %v559 = vunpack.c.l.b16 %v520
        %v560 = vunpack.c.l.b16 %v521
        %v561 = vpack.c.b16 %v546, %v545
        %v562 = vpack.c.b16 %v548, %v547
        %v563 = vpack.c.b16 %v550, %v549
        %v564 = vpack.c.b16 %v552, %v551
        %v565 = vpack.c.b16 %v554, %v553
        %v566 = vpack.c.b16 %v556, %v555
        %v567 = vpack.c.b16 %v558, %v557
        %v568 = vpack.c.b16 %v560, %v559
        %577 = vmatprep.subr.bf16.mxu0 0
        %578 = vmatpush1.bf16.msra.mxu0 %v561
        %579 = vmatprep.subr.bf16.mxu0 0
        %580 = vmatpush1.bf16.msra.mxu0 %v562
        %581 = vmatprep.subr.bf16.mxu0 0
        %582 = vmatpush1.bf16.msra.mxu0 %v563
        %583 = vmatprep.subr.bf16.mxu0 0
        %584 = vmatpush1.bf16.msra.mxu0 %v564
        %585 = vmatprep.subr.bf16.mxu0 0
        %586 = vmatpush1.bf16.msra.mxu0 %v565
        %587 = vmatprep.subr.bf16.mxu0 0
        %588 = vmatpush1.bf16.msra.mxu0 %v566
        %589 = vmatprep.subr.bf16.mxu0 0
        %590 = vmatpush1.bf16.msra.mxu0 %v567
        %591 = vmatprep.subr.bf16.mxu0 0
        %592 = vmatpush1.bf16.msra.mxu0 %v568
        %593 = vmatprep.subr.bf16.mxu0 0
        %594 = vmatpush1.bf16.msra.mxu0 0
        %595 = vmatprep.subr.bf16.mxu0 0
        %596 = vmatpush1.bf16.msra.mxu0 0
        %597 = vmatprep.subr.bf16.mxu0 0
        %598 = vmatpush1.bf16.msra.mxu0 0
        %599 = vmatprep.subr.bf16.mxu0 0
        %600 = vmatpush1.bf16.msra.mxu0 0
        %601 = vmatprep.subr.bf16.mxu0 0
        %602 = vmatpush1.bf16.msra.mxu0 0
        %603 = vmatprep.subr.bf16.mxu0 0
        %604 = vmatpush1.bf16.msra.mxu0 0
        %605 = vmatprep.subr.bf16.mxu0 0
        %606 = vmatpush1.bf16.msra.mxu0 0
        %607 = vmatprep.subr.bf16.mxu0 0
        %608 = vmatpush1.bf16.msra.mxu0 0
        %609 = vmatprep.mubr.bf16.mxu0 0
        %610 = vmatmul.mubr.bf16.gmra.mrb[0].mxu0 %v505
        %v611 = vpop.f32.mrb[0].mxu0
        %v612 = vadd.f32 %v527, %v611
        %v613 = vpop.f32.mrb[0].mxu0
        %v614 = vpop.f32.mrb[0].mxu0
        %v615 = vadd.f32 %v527, %v614
        %v616 = vpop.f32.mrb[0].mxu0
        %617 = vdwg.mxu0
        %618 = vst [vmem:[%s310] sm:$0xff] %v612
        %619 = vst [vmem:[%s310 + $0x8] sm:$0xff] %v615
        %s620 = smul.u32 2, %s20
        %p621 = scmp.lt.s32.totalorder %s620, 3
        %s622 = scalar_select %p621, %s620, 3
        %s623 = smul.addr %s622, 8
        %s624 = scalar_lea.vmem %s7, %s623
        // Predicated region
        $region57: #{policy_network_forward.1} parent=47 // pred_check
          %p625 = pneg %p190
        $region58: #{policy_network_forward.1} parent=47 // pred_check_branch
          %627 = sbr.rel (%p625) target = $region60
        $region59: #{policy_network_forward.1} parent=47 // pred_region
          %s628 = smul.u32 2, %s20
        $region60: #{policy_network_forward.1} parent=47 // pred_fallthru
          _
      $region48: #{policy_network_forward.1} parent=5 // pred_fallthru
        _
      %p629 = scmp.le.s32.totalorder 2, %s15
      // Predicated region
      $region61: #{policy_network_forward.1} parent=5 // pred_check
        %p630 = pneg %p629
      $region62: #{policy_network_forward.1} parent=5 // pred_check_branch
        %632 = sbr.rel (%p630) target = $region64
      $region63: #{policy_network_forward.1} parent=5 // pred_region
        %s633 = ssub.s32 %s15, 2
        // Predicated region
        $region65: #{policy_network_forward.1} parent=63 // pred_check
          %p634 = pneg %p196
        $region66: #{policy_network_forward.1} parent=63 // pred_check_branch
          %636 = sbr.rel (%p634) target = $region68
        $region67: #{policy_network_forward.1} parent=63 // pred_region
          %s637 = smul.u32 2, %s21
          %p638 = scmp.lt.s32.totalorder %s637, 3
          %s639 = scalar_select %p638, %s637, 3
          %s640 = smul.addr %s639, 8
          %s641 = scalar_lea.vmem %s7, %s640
        $region68: #{policy_network_forward.1} parent=63 // pred_fallthru
          _
      $region64: #{policy_network_forward.1} parent=5 // pred_fallthru
        _
    $region6: #{policy_network_forward.1} parent=1 // loop_footer
      %s19 = sadd.s32 1, %s15
    $region7: #{policy_network_forward.1} parent=1 // loop_footer_branch
      %14 = sbr.rel target = $region3
    $region8: #{policy_network_forward.1} parent=1 // loop_exit
      _
    %642 = vsyncpa [#allocation3], 1
    %s643 = scalar_lea.sflag [#allocation3], 1
    %644 = vsyncpa %s643, 1
    %645 = vsyncpa [#allocation5], 1

</llo_original>
